<compile_context>
chip_gen: v5e
topology: v5e:2x2
jax: 0.10.0
libtpu: 0.0.40
codegen_flags: <defaults>
</compile_context>

<pallas_src>
import jax
import jax.numpy as jnp
from jax.experimental import pallas as pl
from jax.experimental.pallas import tpu as pltpu


def _linear_head_kernel(x_ref, w_ref, b_ref, o_ref):
    # x_ref: (TB, K)   w_ref: (K, NP)   b_ref: (1, NP)   o_ref: (TB, N_OUT)
    acc = jnp.dot(x_ref[...], w_ref[...], preferred_element_type=jnp.float32)
    res = acc + b_ref[...]                       # f32 bias add
    n_out = o_ref.shape[-1]
    o_ref[...] = res[:, :n_out].astype(o_ref.dtype)


def _round_up(v, m):
    return ((v + m - 1) // m) * m


def _pick_batch_tile(B, tb):
    """Batch tile: multiple of 8 (or full-extent for tiny B), >= 2 grid steps
    whenever B >= 16 so both v7x TensorCores get work."""
    if B < 16:
        return B                                  # full-extent block (legal for any B)
    half = pl.cdiv(B, 2)
    return min(tb, _round_up(half, 8))


def linear_head(x, w_packed, b_packed, out_features, *, tb=1024):
    """y = x @ W_packed[:, :out_features] + b, returned as (B, out_features).

    x:        (B, K)  activations (f32 or bf16), consumed unpadded.
    w_packed: (K, NP) pre-transposed, lane-padded weight (NP multiple of 128).
    b_packed: (1, NP) lane-padded bias, float32.
    """
    B, K = x.shape
    KW, NP = w_packed.shape
    assert KW == K, (KW, K)
    assert NP % 128 == 0, NP

    TB = _pick_batch_tile(B, tb)
    grid_b = pl.cdiv(B, TB)          # ragged last block is handled by Pallas

    # Explicit VMEM budget: double-buffered x / w / b / out blocks + headroom.
    x_bytes = TB * K * x.dtype.itemsize
    w_bytes = K * NP * w_packed.dtype.itemsize
    b_bytes = NP * b_packed.dtype.itemsize
    o_bytes = TB * out_features * x.dtype.itemsize
    vmem_bytes = 2 * (x_bytes + w_bytes + b_bytes + o_bytes) + (2 << 20)
    vmem_bytes = int(min(max(vmem_bytes, 4 << 20), 48 << 20))

    return pl.pallas_call(
        _linear_head_kernel,
        out_shape=jax.ShapeDtypeStruct((B, out_features), x.dtype),
        grid=(grid_b,),
        in_specs=[
            pl.BlockSpec((TB, K), lambda i: (i, 0)),    # activations, tiled
            pl.BlockSpec((K, NP), lambda i: (0, 0)),    # weight, resident
            pl.BlockSpec((1, NP), lambda i: (0, 0)),    # bias, resident
        ],
        out_specs=pl.BlockSpec((TB, out_features), lambda i: (i, 0)),
        compiler_params=pltpu.CompilerParams(
            dimension_semantics=("parallel",),
            vmem_limit_bytes=vmem_bytes,
        ),
    )(x, w_packed, b_packed)


class ModelsPallas:
    """Pallas equivalent of the PyTorch `Models` module's forward pass.

    forward(features) = Linear(1000, 2)(features), where `features` is the
    (B, 1000) output of the external backbone `net`.
    """

    def __init__(self, key, in_features=1000, out_features=2,
                 compute_dtype=jnp.float32, pallas_min_batch=256):
        # Deterministic init matching nn.Linear defaults:
        # U(-1/sqrt(in_features), 1/sqrt(in_features)) for weight and bias.
        kw, kb = jax.random.split(key)
        bound = 1.0 / jnp.sqrt(jnp.float32(in_features))
        self.weight = jax.random.uniform(
            kw, (out_features, in_features), jnp.float32, -bound, bound)
        self.bias = jax.random.uniform(
            kb, (out_features,), jnp.float32, -bound, bound)
        self.out_features = out_features
        self.pallas_min_batch = pallas_min_batch

        # Pre-pack parameters ONCE: transpose to (in, out), pad lanes to 128,
        # cast to the compute dtype (bf16 halves the one-time weight DMA and
        # keeps the MXU in its fast bf16 path; accumulation stays f32).
        NP = max(128, _round_up(out_features, 128))
        self.w_packed = (
            jnp.zeros((in_features, NP), compute_dtype)
            .at[:, :out_features]
            .set(jnp.transpose(self.weight).astype(compute_dtype))
        )
        self.b_packed = (
            jnp.zeros((1, NP), jnp.float32)
            .at[0, :out_features]
            .set(self.bias.astype(jnp.float32))
        )

    def __call__(self, features):
        B = features.shape[0]
        if B < self.pallas_min_batch:
            # Launch-overhead / DMA-latency-bound regime: let XLA fuse the
            # tiny (1000 x 2) matvec instead of a standalone pallas_call.
            y = (features.astype(jnp.float32) @ self.weight.T
                 + self.bias).astype(features.dtype)
            return y
        return linear_head(features, self.w_packed, self.b_packed,
                           self.out_features)


if __name__ == "__main__":
    key = jax.random.PRNGKey(0)
    k1, k2, kp = jax.random.split(key, 3)

    FEAT = 1000  # dictated by Linear(1000, 2) in the module's __init__
    model = ModelsPallas(kp, in_features=FEAT, out_features=2)

    # (1) Small batch forced through the Pallas kernel (single full-extent block).
    B_small = 2
    feats_small = jax.random.normal(k1, (B_small, FEAT), dtype=jnp.float32)
    out_small = jax.block_until_ready(
        linear_head(feats_small, model.w_packed, model.b_packed,
                    model.out_features))
    ref_small = feats_small @ model.weight.T + model.bias
    assert out_small.shape == (B_small, 2), out_small.shape
    assert jnp.allclose(out_small, ref_small, atol=1e-4, rtol=1e-4), \
        "small-batch Pallas mismatch vs reference"

    # (2) Moderate batch through the dispatching __call__: Pallas path with a
    #     2-step grid (v7x megacore split) and a ragged last block.
    B_big = 300
    feats_big = jax.random.normal(k2, (B_big, FEAT), dtype=jnp.float32)
    out_big = jax.block_until_ready(model(feats_big))
    ref_big = feats_big @ model.weight.T + model.bias
    assert out_big.shape == (B_big, 2), out_big.shape
    assert jnp.allclose(out_big, ref_big, atol=1e-4, rtol=1e-4), \
        "tiled Pallas mismatch vs reference"

    # (3) Tiny batch through the dispatcher (plain-JAX fast path).
    out_tiny = jax.block_until_ready(model(feats_small))
    assert jnp.allclose(out_tiny, ref_small, atol=1e-4, rtol=1e-4), \
        "small-batch fast path mismatch vs reference"

    print("KERNEL_OK")
</pallas_src>

<mosaic_0001>
module attributes {stable_mosaic.version = 11 : i64} {
  func.func @_linear_head_kernel(%arg0: i32, %arg1: memref<2x1000xf32, #tpu.memory_space<vmem>>, %arg2: memref<1000x128xf32, #tpu.memory_space<vmem>>, %arg3: memref<1x128xf32, #tpu.memory_space<vmem>>, %arg4: memref<2x2xf32, #tpu.memory_space<vmem>>) attributes {dimension_semantics = [#tpu.dimension_semantics<parallel>], iteration_bounds = array<i64: 1>, scalar_prefetch = 0 : i64, scratch_operands = 0 : i64, tpu.core_type = #tpu.core_type<tc>, window_params = [{transform_indices = @transform_0, window_bounds = array<i64: 2, 1000>}, {pipeline_mode = #tpu.pipeline_mode<synchronous>, transform_indices = @transform_1, window_bounds = array<i64: 1000, 128>}, {pipeline_mode = #tpu.pipeline_mode<synchronous>, transform_indices = @transform_2, window_bounds = array<i64: 1, 128>}, {transform_indices = @transform_3, window_bounds = array<i64: 2, 2>}]} {
    %c0 = arith.constant 0 : index
    %c0_0 = arith.constant 0 : index
    %0 = vector.load %arg1[%c0, %c0_0] : memref<2x1000xf32, #tpu.memory_space<vmem>>, vector<2x1000xf32>
    %c0_1 = arith.constant 0 : index
    %c0_2 = arith.constant 0 : index
    %1 = vector.load %arg2[%c0_1, %c0_2] : memref<1000x128xf32, #tpu.memory_space<vmem>>, vector<1000x128xf32>
    %cst = arith.constant dense<0.000000e+00> : vector<2x128xf32>
    %2 = tpu.matmul %0, %1, %cst {dimension_numbers = #tpu.dot_dimension_numbers<[1], [0], [0], [1], [0, 0, 1, 1], [], []>} : vector<2x1000xf32>, vector<1000x128xf32>, vector<2x128xf32> -> vector<2x128xf32>
    %c0_3 = arith.constant 0 : index
    %c0_4 = arith.constant 0 : index
    %3 = vector.load %arg3[%c0_3, %c0_4] : memref<1x128xf32, #tpu.memory_space<vmem>>, vector<1x128xf32>
    %4 = vector.broadcast %3 : vector<1x128xf32> to vector<2x128xf32>
    %5 = arith.addf %2, %4 : vector<2x128xf32>
    %6 = vector.extract_strided_slice %5 {offsets = [0, 0], sizes = [2, 2], strides = [1, 1]} : vector<2x128xf32> to vector<2x2xf32>
    %c0_5 = arith.constant 0 : index
    %c0_6 = arith.constant 0 : index
    %7 = vector.load %arg4[%c0_5, %c0_6] : memref<2x2xf32, #tpu.memory_space<vmem>>, vector<2x2xf32>
    tpu.vector_store %arg4[%c0_5, %c0_6], %6 {strides = array<i32>} : memref<2x2xf32, #tpu.memory_space<vmem>>, vector<2x2xf32>,
    return
  }
  func.func @transform_0(%arg0: i32) -> (i32, i32) {
    %c0_i32 = arith.constant 0 : i32
    %c0_i32_0 = arith.constant 0 : i32
    return %arg0, %c0_i32 : i32, i32
  }
  func.func @transform_1(%arg0: i32) -> (i32, i32) {
    %c0_i32 = arith.constant 0 : i32
    %c0_i32_0 = arith.constant 0 : i32
    %c0_i32_1 = arith.constant 0 : i32
    return %c0_i32, %c0_i32_0 : i32, i32
  }
  func.func @transform_2(%arg0: i32) -> (i32, i32) {
    %c0_i32 = arith.constant 0 : i32
    %c0_i32_0 = arith.constant 0 : i32
    %c0_i32_1 = arith.constant 0 : i32
    return %c0_i32, %c0_i32_0 : i32, i32
  }
  func.func @transform_3(%arg0: i32) -> (i32, i32) {
    %c0_i32 = arith.constant 0 : i32
    %c0_i32_0 = arith.constant 0 : i32
    return %arg0, %c0_i32 : i32, i32
  }
}

</mosaic_0001>

<llo_original>
// kernel: tpu_custom_call.1
$region0: #{tpu_custom_call.1}
  #allocation0 [shape = 'u32[]', space=smem, size = 0x4, offset = 0x4, fixed_abs, tag = 'smem constant byte address 0x4 - core index']
  #allocation1 [shape = 'u32[72,128]{1,0:T(1,128)}', space=vmem, size = 0x9000, scoped, tag = 'internal scratch']
  %s0 = inlined_call_operand.hbm [shape: f32[2,1000], index: 0, kind: input, shape index: {}]
  %s1 = inlined_call_operand.hbm [shape: f32[1000,128], index: 1, kind: input, shape index: {}]
  %s2 = inlined_call_operand.vmem [shape: f32[1,128], index: 2, kind: input, shape index: {}]
  %s3 = inlined_call_operand.hbm [shape: f32[2,2], index: 3, kind: output, shape index: {}]
  %s4 = sld [smem:[#allocation0]]
  $region30: #{tpu_custom_call.1} parent=0
    _
  %s6 = ssub.s32 1, %s4
  %s7 = scalar_select 0, %s6, %s4
  $region1: #{tpu_custom_call.1} parent=0
    #allocation2 [shape = 'u8[8192]{0}', space=vmem, size = 0x2000, scoped, tag = 'input window, operand 0, single buffered']
    #allocation3 [shape = 's32[1]{0}', space=sflag, size = 0x4, scoped, tag = 'scoped memory for tpu_custom_call.1']
    #allocation4 [shape = 's32[1]{0}', space=sflag, size = 0x4, scoped, tag = 'scoped memory for tpu_custom_call.1']
    #allocation5 [shape = 'u8[512000]{0}', space=vmem, size = 0x7d000, scoped, tag = 'input window, operand 1, single buffered']
    #allocation6 [shape = 's32[1]{0}', space=sflag, size = 0x4, scoped, tag = 'scoped memory for tpu_custom_call.1']
    #allocation7 [shape = 'u8[1024]{0}', space=vmem, size = 0x400, scoped, tag = 'output window, operand 0, single buffered']
    %8 = vsyncpa [#allocation3], 0
    %9 = vsyncpa [#allocation6], 0
    %10 = vsyncpa [#allocation4], 0
    // Predicated region
    $region2: #{tpu_custom_call.1} parent=1 // pred_check
      _
    $region3: #{tpu_custom_call.1} parent=1 // pred_check_branch
      %12 = sbr.rel (0) target = $region5
    $region4: #{tpu_custom_call.1} parent=1 // pred_region
      %14 = vsyncadd [#allocation3], 0
      %s16 = sshll.u32 %s0, 4
      %s17 = int_to_ptr.hbm [resolvable:$true] %s16
      %s18 = sshll.u32 [#allocation2], 4
      %s19 = int_to_ptr.vmem [resolvable:$true] %s18
      %21 = dma.hbm_to_vmem [thread:$0]  %s17, 256, %s19, [#allocation3]
    $region5: #{tpu_custom_call.1} parent=1 // pred_fallthru
      _
    // Predicated region
    $region6: #{tpu_custom_call.1} parent=1 // pred_check
      _
    $region7: #{tpu_custom_call.1} parent=1 // pred_check_branch
      %23 = sbr.rel (0) target = $region9
    $region8: #{tpu_custom_call.1} parent=1 // pred_region
      %25 = vsyncadd [#allocation6], 0
      %s26 = sshll.u32 %s1, 4
      %s27 = int_to_ptr.hbm [resolvable:$true] %s26
      %s28 = sshll.u32 [#allocation5], 4
      %s29 = int_to_ptr.vmem [resolvable:$true] %s28
      %34 = dma.hbm_to_vmem [thread:$0]  %s27, 16000, %s29, [#allocation6], 128, 128, 8
    $region9: #{tpu_custom_call.1} parent=1 // pred_fallthru
      _
    // Predicated region
    $region10: #{tpu_custom_call.1} parent=1 // pred_check
      _
    $region11: #{tpu_custom_call.1} parent=1 // pred_check_branch
      %36 = sbr.rel (0) target = $region13
    $region12: #{tpu_custom_call.1} parent=1 // pred_region
      _
    $region13: #{tpu_custom_call.1} parent=1 // pred_fallthru
      _
    // Predicated region
    $region14: #{tpu_custom_call.1} parent=1 // pred_check
      _
    $region15: #{tpu_custom_call.1} parent=1 // pred_check_branch
      %38 = sbr.rel (0) target = $region17
    $region16: #{tpu_custom_call.1} parent=1 // pred_region
      %40 = dma.done [#allocation3], 256
    $region17: #{tpu_custom_call.1} parent=1 // pred_fallthru
      _
    // Predicated region
    $region18: #{tpu_custom_call.1} parent=1 // pred_check
      _
    $region19: #{tpu_custom_call.1} parent=1 // pred_check_branch
      %42 = sbr.rel (0) target = $region21
    $region20: #{tpu_custom_call.1} parent=1 // pred_region
      %44 = dma.done [#allocation6], 16000
    $region21: #{tpu_custom_call.1} parent=1 // pred_fallthru
      _
    %v45 = vld [vmem:[#allocation2] sm:$0xff]
    %v46 = vld [vmem:[#allocation2 + $0x8] sm:$0xff]
    %v47 = vld [vmem:[#allocation5] sm:$0xff]
    %v48 = vld [vmem:[#allocation5 + $0x8] sm:$0xff]
    %v49 = vld [vmem:[#allocation5 + $0x10] sm:$0xff]
    %v50 = vld [vmem:[#allocation5 + $0x18] sm:$0xff]
    %v51 = vld [vmem:[#allocation5 + $0x20] sm:$0xff]
    %v52 = vld [vmem:[#allocation5 + $0x28] sm:$0xff]
    %v53 = vld [vmem:[#allocation5 + $0x30] sm:$0xff]
    %v54 = vld [vmem:[#allocation5 + $0x38] sm:$0xff]
    %v55 = vld [vmem:[#allocation5 + $0x40] sm:$0xff]
    %v56 = vld [vmem:[#allocation5 + $0x48] sm:$0xff]
    %v57 = vld [vmem:[#allocation5 + $0x50] sm:$0xff]
    %v58 = vld [vmem:[#allocation5 + $0x58] sm:$0xff]
    %v59 = vld [vmem:[#allocation5 + $0x60] sm:$0xff]
    %v60 = vld [vmem:[#allocation5 + $0x68] sm:$0xff]
    %v61 = vld [vmem:[#allocation5 + $0x70] sm:$0xff]
    %v62 = vld [vmem:[#allocation5 + $0x78] sm:$0xff]
    %v63 = vld [vmem:[#allocation5 + $0x80] sm:$0xff]
    %v64 = vld [vmem:[#allocation5 + $0x88] sm:$0xff]
    %v65 = vld [vmem:[#allocation5 + $0x90] sm:$0xff]
    %v66 = vld [vmem:[#allocation5 + $0x98] sm:$0xff]
    %v67 = vld [vmem:[#allocation5 + $0xa0] sm:$0xff]
    %v68 = vld [vmem:[#allocation5 + $0xa8] sm:$0xff]
    %v69 = vld [vmem:[#allocation5 + $0xb0] sm:$0xff]
    %v70 = vld [vmem:[#allocation5 + $0xb8] sm:$0xff]
    %v71 = vld [vmem:[#allocation5 + $0xc0] sm:$0xff]
    %v72 = vld [vmem:[#allocation5 + $0xc8] sm:$0xff]
    %v73 = vld [vmem:[#allocation5 + $0xd0] sm:$0xff]
    %v74 = vld [vmem:[#allocation5 + $0xd8] sm:$0xff]
    %v75 = vld [vmem:[#allocation5 + $0xe0] sm:$0xff]
    %v76 = vld [vmem:[#allocation5 + $0xe8] sm:$0xff]
    %v77 = vld [vmem:[#allocation5 + $0xf0] sm:$0xff]
    %v78 = vld [vmem:[#allocation5 + $0xf8] sm:$0xff]
    %v79 = vld [vmem:[#allocation5 + $0x100] sm:$0xff]
    %v80 = vld [vmem:[#allocation5 + $0x108] sm:$0xff]
    %v81 = vld [vmem:[#allocation5 + $0x110] sm:$0xff]
    %v82 = vld [vmem:[#allocation5 + $0x118] sm:$0xff]
    %v83 = vld [vmem:[#allocation5 + $0x120] sm:$0xff]
    %v84 = vld [vmem:[#allocation5 + $0x128] sm:$0xff]
    %v85 = vld [vmem:[#allocation5 + $0x130] sm:$0xff]
    %v86 = vld [vmem:[#allocation5 + $0x138] sm:$0xff]
    %v87 = vld [vmem:[#allocation5 + $0x140] sm:$0xff]
    %v88 = vld [vmem:[#allocation5 + $0x148] sm:$0xff]
    %v89 = vld [vmem:[#allocation5 + $0x150] sm:$0xff]
    %v90 = vld [vmem:[#allocation5 + $0x158] sm:$0xff]
    %v91 = vld [vmem:[#allocation5 + $0x160] sm:$0xff]
    %v92 = vld [vmem:[#allocation5 + $0x168] sm:$0xff]
    %v93 = vld [vmem:[#allocation5 + $0x170] sm:$0xff]
    %v94 = vld [vmem:[#allocation5 + $0x178] sm:$0xff]
    %v95 = vld [vmem:[#allocation5 + $0x180] sm:$0xff]
    %v96 = vld [vmem:[#allocation5 + $0x188] sm:$0xff]
    %v97 = vld [vmem:[#allocation5 + $0x190] sm:$0xff]
    %v98 = vld [vmem:[#allocation5 + $0x198] sm:$0xff]
    %v99 = vld [vmem:[#allocation5 + $0x1a0] sm:$0xff]
    %v100 = vld [vmem:[#allocation5 + $0x1a8] sm:$0xff]
    %v101 = vld [vmem:[#allocation5 + $0x1b0] sm:$0xff]
    %v102 = vld [vmem:[#allocation5 + $0x1b8] sm:$0xff]
    %v103 = vld [vmem:[#allocation5 + $0x1c0] sm:$0xff]
    %v104 = vld [vmem:[#allocation5 + $0x1c8] sm:$0xff]
    %v105 = vld [vmem:[#allocation5 + $0x1d0] sm:$0xff]
    %v106 = vld [vmem:[#allocation5 + $0x1d8] sm:$0xff]
    %v107 = vld [vmem:[#allocation5 + $0x1e0] sm:$0xff]
    %v108 = vld [vmem:[#allocation5 + $0x1e8] sm:$0xff]
    %v109 = vld [vmem:[#allocation5 + $0x1f0] sm:$0xff]
    %v110 = vld [vmem:[#allocation5 + $0x1f8] sm:$0xff]
    %v111 = vld [vmem:[#allocation5 + $0x200] sm:$0xff]
    %v112 = vld [vmem:[#allocation5 + $0x208] sm:$0xff]
    %v113 = vld [vmem:[#allocation5 + $0x210] sm:$0xff]
    %v114 = vld [vmem:[#allocation5 + $0x218] sm:$0xff]
    %v115 = vld [vmem:[#allocation5 + $0x220] sm:$0xff]
    %v116 = vld [vmem:[#allocation5 + $0x228] sm:$0xff]
    %v117 = vld [vmem:[#allocation5 + $0x230] sm:$0xff]
    %v118 = vld [vmem:[#allocation5 + $0x238] sm:$0xff]
    %v119 = vld [vmem:[#allocation5 + $0x240] sm:$0xff]
    %v120 = vld [vmem:[#allocation5 + $0x248] sm:$0xff]
    %v121 = vld [vmem:[#allocation5 + $0x250] sm:$0xff]
    %v122 = vld [vmem:[#allocation5 + $0x258] sm:$0xff]
    %v123 = vld [vmem:[#allocation5 + $0x260] sm:$0xff]
    %v124 = vld [vmem:[#allocation5 + $0x268] sm:$0xff]
    %v125 = vld [vmem:[#allocation5 + $0x270] sm:$0xff]
    %v126 = vld [vmem:[#allocation5 + $0x278] sm:$0xff]
    %v127 = vld [vmem:[#allocation5 + $0x280] sm:$0xff]
    %v128 = vld [vmem:[#allocation5 + $0x288] sm:$0xff]
    %v129 = vld [vmem:[#allocation5 + $0x290] sm:$0xff]
    %v130 = vld [vmem:[#allocation5 + $0x298] sm:$0xff]
    %v131 = vld [vmem:[#allocation5 + $0x2a0] sm:$0xff]
    %v132 = vld [vmem:[#allocation5 + $0x2a8] sm:$0xff]
    %v133 = vld [vmem:[#allocation5 + $0x2b0] sm:$0xff]
    %v134 = vld [vmem:[#allocation5 + $0x2b8] sm:$0xff]
    %v135 = vld [vmem:[#allocation5 + $0x2c0] sm:$0xff]
    %v136 = vld [vmem:[#allocation5 + $0x2c8] sm:$0xff]
    %v137 = vld [vmem:[#allocation5 + $0x2d0] sm:$0xff]
    %v138 = vld [vmem:[#allocation5 + $0x2d8] sm:$0xff]
    %v139 = vld [vmem:[#allocation5 + $0x2e0] sm:$0xff]
    %v140 = vld [vmem:[#allocation5 + $0x2e8] sm:$0xff]
    %v141 = vld [vmem:[#allocation5 + $0x2f0] sm:$0xff]
    %v142 = vld [vmem:[#allocation5 + $0x2f8] sm:$0xff]
    %v143 = vld [vmem:[#allocation5 + $0x300] sm:$0xff]
    %v144 = vld [vmem:[#allocation5 + $0x308] sm:$0xff]
    %v145 = vld [vmem:[#allocation5 + $0x310] sm:$0xff]
    %v146 = vld [vmem:[#allocation5 + $0x318] sm:$0xff]
    %v147 = vld [vmem:[#allocation5 + $0x320] sm:$0xff]
    %v148 = vld [vmem:[#allocation5 + $0x328] sm:$0xff]
    %v149 = vld [vmem:[#allocation5 + $0x330] sm:$0xff]
    %v150 = vld [vmem:[#allocation5 + $0x338] sm:$0xff]
    %v151 = vld [vmem:[#allocation5 + $0x340] sm:$0xff]
    %v152 = vld [vmem:[#allocation5 + $0x348] sm:$0xff]
    %v153 = vld [vmem:[#allocation5 + $0x350] sm:$0xff]
    %v154 = vld [vmem:[#allocation5 + $0x358] sm:$0xff]
    %v155 = vld [vmem:[#allocation5 + $0x360] sm:$0xff]
    %v156 = vld [vmem:[#allocation5 + $0x368] sm:$0xff]
    %v157 = vld [vmem:[#allocation5 + $0x370] sm:$0xff]
    %v158 = vld [vmem:[#allocation5 + $0x378] sm:$0xff]
    %v159 = vld [vmem:[#allocation5 + $0x380] sm:$0xff]
    %v160 = vld [vmem:[#allocation5 + $0x388] sm:$0xff]
    %v161 = vld [vmem:[#allocation5 + $0x390] sm:$0xff]
    %v162 = vld [vmem:[#allocation5 + $0x398] sm:$0xff]
    %v163 = vld [vmem:[#allocation5 + $0x3a0] sm:$0xff]
    %v164 = vld [vmem:[#allocation5 + $0x3a8] sm:$0xff]
    %v165 = vld [vmem:[#allocation5 + $0x3b0] sm:$0xff]
    %v166 = vld [vmem:[#allocation5 + $0x3b8] sm:$0xff]
    %v167 = vld [vmem:[#allocation5 + $0x3c0] sm:$0xff]
    %v168 = vld [vmem:[#allocation5 + $0x3c8] sm:$0xff]
    %v169 = vld [vmem:[#allocation5 + $0x3d0] sm:$0xff]
    %v170 = vld [vmem:[#allocation5 + $0x3d8] sm:$0xff]
    %v171 = vld [vmem:[#allocation5 + $0x3e0] sm:$0xff]
    %v172 = vld [vmem:[%s2] sm:$0x1]
    %v174 = vperm.slane %v172, 0
    %178 = vst [vmem:[#allocation1] ss:$4 sm:$0xff] %v45
    %s179 = scalar_lea.vmem [#allocation1], 32
    %180 = vst [vmem:[%s179] ss:$4 sm:$0xff] %v46
    %v181 = vld.sshfl [vmem:[#allocation1] sm:$0xff pattern:$0x73625140]
    %v182 = vld.sshfl [vmem:[#allocation1 + $0x8] sm:$0xff pattern:$0x73625140]
    %v183 = vld.sshfl [vmem:[#allocation1 + $0x10] sm:$0xff pattern:$0x73625140]
    %v184 = vld.sshfl [vmem:[#allocation1 + $0x18] sm:$0xff pattern:$0x73625140]
    %v185 = vld.sshfl [vmem:[#allocation1 + $0x20] sm:$0xff pattern:$0x73625140]
    %v186 = vld.sshfl [vmem:[#allocation1 + $0x28] sm:$0xff pattern:$0x73625140]
    %v187 = vld.sshfl [vmem:[#allocation1 + $0x30] sm:$0xff pattern:$0x73625140]
    %v188 = vld.sshfl [vmem:[#allocation1 + $0x38] sm:$0xff pattern:$0x73625140]
    %vm196 = vcmask 850944
    %v197 = vsel %vm196, %v188, 0
    %199 = vmatpush.msra.mxu0 %v62
    %200 = vmatpush.msra.mxu0 %v61
    %201 = vmatpush.msra.mxu0 %v60
    %202 = vmatpush.msra.mxu0 %v59
    %203 = vmatpush.msra.mxu0 %v58
    %204 = vmatpush.msra.mxu0 %v57
    %205 = vmatpush.msra.mxu0 %v56
    %206 = vmatpush.msra.mxu0 %v55
    %207 = vmatpush.msra.mxu0 %v54
    %208 = vmatpush.msra.mxu0 %v53
    %209 = vmatpush.msra.mxu0 %v52
    %210 = vmatpush.msra.mxu0 %v51
    %211 = vmatpush.msra.mxu0 %v50
    %212 = vmatpush.msra.mxu0 %v49
    %213 = vmatpush.msra.mxu0 %v48
    %214 = vmatpush.msra.mxu0 %v47
    %215 = vmatmul.f32.gmra.mxu0 %v181
    %v216 = vpop.f32.mrf.mxu0
    %v217 = vadd.f32 %v174, %v216
    %218 = vdwg.mxu0
    %219 = vmatpush.msra.mxu0 %v78
    %220 = vmatpush.msra.mxu0 %v77
    %221 = vmatpush.msra.mxu0 %v76
    %222 = vmatpush.msra.mxu0 %v75
    %223 = vmatpush.msra.mxu0 %v74
    %224 = vmatpush.msra.mxu0 %v73
    %225 = vmatpush.msra.mxu0 %v72
    %226 = vmatpush.msra.mxu0 %v71
    %227 = vmatpush.msra.mxu0 %v70
    %228 = vmatpush.msra.mxu0 %v69
    %229 = vmatpush.msra.mxu0 %v68
    %230 = vmatpush.msra.mxu0 %v67
    %231 = vmatpush.msra.mxu0 %v66
    %232 = vmatpush.msra.mxu0 %v65
    %233 = vmatpush.msra.mxu0 %v64
    %234 = vmatpush.msra.mxu0 %v63
    %235 = vmatmul.f32.gmra.mxu0 %v182
    %v236 = vpop.f32.mrf.mxu0
    %v237 = vadd.f32 %v217, %v236
    %238 = vdwg.mxu0
    %239 = vmatpush.msra.mxu0 %v94
    %240 = vmatpush.msra.mxu0 %v93
    %241 = vmatpush.msra.mxu0 %v92
    %242 = vmatpush.msra.mxu0 %v91
    %243 = vmatpush.msra.mxu0 %v90
    %244 = vmatpush.msra.mxu0 %v89
    %245 = vmatpush.msra.mxu0 %v88
    %246 = vmatpush.msra.mxu0 %v87
    %247 = vmatpush.msra.mxu0 %v86
    %248 = vmatpush.msra.mxu0 %v85
    %249 = vmatpush.msra.mxu0 %v84
    %250 = vmatpush.msra.mxu0 %v83
    %251 = vmatpush.msra.mxu0 %v82
    %252 = vmatpush.msra.mxu0 %v81
    %253 = vmatpush.msra.mxu0 %v80
    %254 = vmatpush.msra.mxu0 %v79
    %255 = vmatmul.f32.gmra.mxu0 %v183
    %v256 = vpop.f32.mrf.mxu0
    %v257 = vadd.f32 %v237, %v256
    %258 = vdwg.mxu0
    %259 = vmatpush.msra.mxu0 %v110
    %260 = vmatpush.msra.mxu0 %v109
    %261 = vmatpush.msra.mxu0 %v108
    %262 = vmatpush.msra.mxu0 %v107
    %263 = vmatpush.msra.mxu0 %v106
    %264 = vmatpush.msra.mxu0 %v105
    %265 = vmatpush.msra.mxu0 %v104
    %266 = vmatpush.msra.mxu0 %v103
    %267 = vmatpush.msra.mxu0 %v102
    %268 = vmatpush.msra.mxu0 %v101
    %269 = vmatpush.msra.mxu0 %v100
    %270 = vmatpush.msra.mxu0 %v99
    %271 = vmatpush.msra.mxu0 %v98
    %272 = vmatpush.msra.mxu0 %v97
    %273 = vmatpush.msra.mxu0 %v96
    %274 = vmatpush.msra.mxu0 %v95
    %275 = vmatmul.f32.gmra.mxu0 %v184
    %v276 = vpop.f32.mrf.mxu0
    %v277 = vadd.f32 %v257, %v276
    %278 = vdwg.mxu0
    %279 = vmatpush.msra.mxu0 %v126
    %280 = vmatpush.msra.mxu0 %v125
    %281 = vmatpush.msra.mxu0 %v124
    %282 = vmatpush.msra.mxu0 %v123
    %283 = vmatpush.msra.mxu0 %v122
    %284 = vmatpush.msra.mxu0 %v121
    %285 = vmatpush.msra.mxu0 %v120
    %286 = vmatpush.msra.mxu0 %v119
    %287 = vmatpush.msra.mxu0 %v118
    %288 = vmatpush.msra.mxu0 %v117
    %289 = vmatpush.msra.mxu0 %v116
    %290 = vmatpush.msra.mxu0 %v115
    %291 = vmatpush.msra.mxu0 %v114
    %292 = vmatpush.msra.mxu0 %v113
    %293 = vmatpush.msra.mxu0 %v112
    %294 = vmatpush.msra.mxu0 %v111
    %295 = vmatmul.f32.gmra.mxu0 %v185
    %v296 = vpop.f32.mrf.mxu0
    %v297 = vadd.f32 %v277, %v296
    %298 = vdwg.mxu0
    %299 = vmatpush.msra.mxu0 %v142
    %300 = vmatpush.msra.mxu0 %v141
    %301 = vmatpush.msra.mxu0 %v140
    %302 = vmatpush.msra.mxu0 %v139
    %303 = vmatpush.msra.mxu0 %v138
    %304 = vmatpush.msra.mxu0 %v137
    %305 = vmatpush.msra.mxu0 %v136
    %306 = vmatpush.msra.mxu0 %v135
    %307 = vmatpush.msra.mxu0 %v134
    %308 = vmatpush.msra.mxu0 %v133
    %309 = vmatpush.msra.mxu0 %v132
    %310 = vmatpush.msra.mxu0 %v131
    %311 = vmatpush.msra.mxu0 %v130
    %312 = vmatpush.msra.mxu0 %v129
    %313 = vmatpush.msra.mxu0 %v128
    %314 = vmatpush.msra.mxu0 %v127
    %315 = vmatmul.f32.gmra.mxu0 %v186
    %v316 = vpop.f32.mrf.mxu0
    %v317 = vadd.f32 %v297, %v316
    %318 = vdwg.mxu0
    %319 = vmatpush.msra.mxu0 %v158
    %320 = vmatpush.msra.mxu0 %v157
    %321 = vmatpush.msra.mxu0 %v156
    %322 = vmatpush.msra.mxu0 %v155
    %323 = vmatpush.msra.mxu0 %v154
    %324 = vmatpush.msra.mxu0 %v153
    %325 = vmatpush.msra.mxu0 %v152
    %326 = vmatpush.msra.mxu0 %v151
    %327 = vmatpush.msra.mxu0 %v150
    %328 = vmatpush.msra.mxu0 %v149
    %329 = vmatpush.msra.mxu0 %v148
    %330 = vmatpush.msra.mxu0 %v147
    %331 = vmatpush.msra.mxu0 %v146
    %332 = vmatpush.msra.mxu0 %v145
    %333 = vmatpush.msra.mxu0 %v144
    %334 = vmatpush.msra.mxu0 %v143
    %335 = vmatmul.f32.gmra.mxu0 %v187
    %v336 = vpop.f32.mrf.mxu0
    %v337 = vadd.f32 %v317, %v336
    %338 = vdwg.mxu0
    %339 = vmatpush.msra.mxu0 0.0
    %340 = vmatpush.msra.mxu0 0.0
    %341 = vmatpush.msra.mxu0 0.0
    %342 = vmatpush.msra.mxu0 %v171
    %343 = vmatpush.msra.mxu0 %v170
    %344 = vmatpush.msra.mxu0 %v169
    %345 = vmatpush.msra.mxu0 %v168
    %346 = vmatpush.msra.mxu0 %v167
    %347 = vmatpush.msra.mxu0 %v166
    %348 = vmatpush.msra.mxu0 %v165
    %349 = vmatpush.msra.mxu0 %v164
    %350 = vmatpush.msra.mxu0 %v163
    %351 = vmatpush.msra.mxu0 %v162
    %352 = vmatpush.msra.mxu0 %v161
    %353 = vmatpush.msra.mxu0 %v160
    %354 = vmatpush.msra.mxu0 %v159
    %355 = vmatmul.f32.gmra.mxu0 %v197
    %v356 = vpop.f32.mrf.mxu0
    %v357 = vadd.f32 %v337, %v356
    %358 = vdwg.mxu0
    %vm359 = vcmask 9216
    %360 = vst.msk [vmem:[#allocation7] sm:$0x3] %vm359, %v357
    // Predicated region
    $region22: #{tpu_custom_call.1} parent=1 // pred_check
      _
    $region23: #{tpu_custom_call.1} parent=1 // pred_check_branch
      %362 = sbr.rel (0) target = $region25
    $region24: #{tpu_custom_call.1} parent=1 // pred_region
      %364 = vsyncadd [#allocation4], 0
      %s366 = sshll.u32 [#allocation7], 4
      %s367 = int_to_ptr.vmem [resolvable:$true] %s366
      %s368 = sshll.u32 %s3, 4
      %s369 = int_to_ptr.hbm [resolvable:$true] %s368
      %371 = dma.vmem_to_hbm [thread:$0]  %s367, 32, %s369, [#allocation4]
    $region25: #{tpu_custom_call.1} parent=1 // pred_fallthru
      _
    // Predicated region
    $region26: #{tpu_custom_call.1} parent=1 // pred_check
      _
    $region27: #{tpu_custom_call.1} parent=1 // pred_check_branch
      %373 = sbr.rel (0) target = $region29
    $region28: #{tpu_custom_call.1} parent=1 // pred_region
      %375 = dma.done [#allocation4], 32
    $region29: #{tpu_custom_call.1} parent=1 // pred_fallthru
      _
    %376 = vsyncpa [#allocation3], 1
    %377 = vsyncpa [#allocation6], 1
    %378 = vsyncpa [#allocation4], 1

</llo_original>
